<compile_context>
chip_gen: v7x
topology: tpu7x:2x2x1
jax: 0.10.0
libtpu: 0.0.40
codegen_flags: <defaults>
</compile_context>

<pallas_src>
import math
import functools

import jax
import jax.numpy as jnp
from jax.experimental import pallas as pl
from jax.experimental.pallas import tpu as pltpu

LANE = 128
SUBLANE = 8


def _round_up(x, m):
    return ((x + m - 1) // m) * m


# ----------------------------- Pallas kernel --------------------------------

def _fused_mlp_kernel(*refs, n_layers, bias_slices):
    """refs = (x_ref, w0, ..., w_{L-1}, bias_all_ref, o_ref).

    Runs the whole MLP on one batch tile; intermediate activations never leave
    VMEM/vregs.  Hidden layers: Linear -> ReLU.  Output layer: Linear only.
    Matmuls accumulate in f32; bias-add / ReLU epilogue stays in f32.
    """
    x_ref = refs[0]
    w_refs = refs[1:1 + n_layers]
    b_ref = refs[1 + n_layers]
    o_ref = refs[2 + n_layers]

    h = x_ref[...]
    for ii in range(n_layers):
        w = w_refs[ii][...]
        # Cast activations to the weight dtype (no-op for f32, bf16 for the
        # MXU-native path); accumulate in f32 on the MXU.
        h = jnp.dot(h.astype(w.dtype), w, preferred_element_type=jnp.float32)
        off, size = bias_slices[ii]               # static python ints
        h = h + b_ref[:, off:off + size]          # (1, size) broadcasts over rows
        if ii < n_layers - 1:                     # ReLU on hidden layers only
            h = jnp.maximum(h, 0.0)
    o_ref[...] = h.astype(o_ref.dtype)


def fused_mlp_pallas(x8, weights, bias_all, bias_slices, tile_b, vmem_limit):
    """x8: (B8, Din) with B8 a multiple of 8; weights[i]: (K_i, Dout_pad_i)."""
    B8, Din = x8.shape
    n_layers = len(weights)
    dout_pad = weights[-1].shape[1]

    in_specs = [pl.BlockSpec((tile_b, Din), lambda i: (i, 0))]
    for w in weights:
        # Grid-invariant block -> fetched once; single buffer saves VMEM.
        in_specs.append(pl.BlockSpec(w.shape, lambda i: (0, 0),
                                     pipeline_mode=pl.Buffered(1)))
    in_specs.append(pl.BlockSpec(bias_all.shape, lambda i: (0, 0),
                                 pipeline_mode=pl.Buffered(1)))

    kernel = functools.partial(_fused_mlp_kernel, n_layers=n_layers,
                               bias_slices=bias_slices)
    return pl.pallas_call(
        kernel,
        out_shape=jax.ShapeDtypeStruct((B8, dout_pad), jnp.float32),
        grid=(pl.cdiv(B8, tile_b),),
        in_specs=in_specs,
        out_specs=pl.BlockSpec((tile_b, dout_pad), lambda i: (i, 0)),
        compiler_params=pltpu.CompilerParams(
            # Batch tiles are independent -> shard across TensorCores.
            dimension_semantics=("parallel",),
            vmem_limit_bytes=vmem_limit,
        ),
    )(x8, *weights, bias_all)


# ----------------------------- Parameter init -------------------------------

def xavier_uniform(key, fan_out, fan_in, gain):
    # Matches torch.nn.init.xavier_uniform_ on a (fan_out, fan_in) weight.
    a = gain * math.sqrt(6.0 / (fan_in + fan_out))
    return jax.random.uniform(key, (fan_out, fan_in), dtype=jnp.float32,
                              minval=-a, maxval=a)


def init_mlp_params(key, dims, activation='relu'):
    """Replicates mlp.__init__ with init='xavier_uniform', use_bn=False."""
    assert len(dims) >= 3
    if activation == 'relu':
        gain_act = math.sqrt(2.0)
    elif activation == 'leaky_relu':
        gain_act = math.sqrt(2.0 / (1.0 + 0.3 ** 2))
    else:
        gain_act = 1.0
    gain_sigmoid = 1.0

    params = []
    keys = jax.random.split(key, len(dims) - 1)
    for ii in range(len(dims) - 2):                              # hidden layers
        w = xavier_uniform(keys[ii], dims[ii + 1], dims[ii], gain_act)
        b = jnp.zeros((dims[ii + 1],), jnp.float32)
        params.append((w, b))
    w_out = xavier_uniform(keys[-1], dims[-1], dims[-2], gain_sigmoid)  # output
    b_out = jnp.zeros((dims[-1],), jnp.float32)
    params.append((w_out, b_out))
    return params


def prep_params_for_kernel(params, weight_dtype=jnp.float32):
    """One-time prep:
      * transpose weights to (Din, Dout),
      * pad ONLY the output (lane) dim to a multiple of 128 (the contracting
        dim is padded only where it must match the previous layer's padded
        output; the first layer's K stays raw),
      * concatenate all (f32) biases into one lane-dense (1, sum Dout_pad) row,
      * optionally store weights in bf16 (MXU-native on v6e/v7x).
    Returns (weights, bias_all, bias_slices)."""
    weights, bias_chunks, bias_slices = [], [], []
    prev_out_pad = None
    off = 0
    for (w, b) in params:
        dout, din = w.shape
        din_eff = din if prev_out_pad is None else prev_out_pad
        dout_pad = _round_up(dout, LANE)
        w_pad = jnp.zeros((din_eff, dout_pad), jnp.float32)
        w_pad = w_pad.at[:din, :dout].set(w.T)
        weights.append(w_pad.astype(weight_dtype))
        bias_chunks.append(jnp.zeros((dout_pad,), jnp.float32).at[:dout].set(b))
        bias_slices.append((off, dout_pad))
        off += dout_pad
        prev_out_pad = dout_pad
    bias_all = jnp.concatenate(bias_chunks).reshape(1, -1)
    return weights, bias_all, tuple(bias_slices)


# ----------------------------- Tiling heuristics -----------------------------

def _choose_tile_and_vmem(B8, din, weights, dout_pad):
    """Pick the largest sublane-aligned batch tile that fits a conservative
    VMEM budget (valid on v7x's 64 MiB), with >=2 grid steps when possible."""
    bytes_w = sum(w.size * w.dtype.itemsize for w in weights)   # Buffered(1)
    bytes_w += weights[-1].shape[1] * len(weights) * 4          # bias row (approx)
    widths = [din] + [w.shape[1] for w in weights]
    # Per-row f32 activation bytes: double-buffered x/out tiles + widest
    # intermediate (compiler scratch, generously x2).
    per_row = 4 * (2 * din + 2 * dout_pad + 2 * max(widths))
    budget = 40 * 1024 * 1024
    avail = max(budget - bytes_w, 2 * 1024 * 1024)
    cap = max(SUBLANE, (avail // per_row) // SUBLANE * SUBLANE)

    tile_b = min(1024, cap, B8)
    # At least 2 grid steps whenever the batch allows it (v7x has 2 TCs).
    if B8 >= 2 * SUBLANE and tile_b >= B8:
        tile_b = min(cap, _round_up(B8 // 2, SUBLANE))
    tile_b = max(SUBLANE, int(tile_b))

    act_bytes = tile_b * per_row
    vmem_limit = int(min(64 * 1024 * 1024,
                         max(32 * 1024 * 1024, int(1.5 * (bytes_w + act_bytes)))))
    return tile_b, vmem_limit


# ------------------------------- Forward pass --------------------------------

@functools.partial(jax.jit, static_argnames=("bias_slices", "out_dim"))
def mlp_forward(x, weights, bias_all, *, bias_slices, out_dim):
    """Forward of `mlp` (use_bn=False, dropout_prob=0.0, activation='relu')."""
    B, din = x.shape
    dout_pad = weights[-1].shape[1]

    # Only a tiny sublane pad (<= 7 rows); no full tile-sized batch padding.
    B8 = _round_up(B, SUBLANE)
    if B8 != B:
        x = jnp.pad(x, ((0, B8 - B), (0, 0)))

    tile_b, vmem_limit = _choose_tile_and_vmem(B8, din, weights, dout_pad)
    out_pad = fused_mlp_pallas(x, weights, bias_all, bias_slices, tile_b, vmem_limit)
    return out_pad[:B, :out_dim]


# Pure-JAX reference mirroring the kernel's math (and the PyTorch forward).
def mlp_reference(x, params, weight_dtype=jnp.float32):
    h = x
    n = len(params)
    for ii, (w, b) in enumerate(params):
        h = jnp.dot(h.astype(weight_dtype), w.T.astype(weight_dtype),
                    preferred_element_type=jnp.float32) + b
        if ii < n - 1:
            h = jnp.maximum(h, 0.0)
    return h


# TODO(synk): spectral_norm_parallel (power-iteration regularizer) is not part
# of the forward pass and is not implemented here.
# TODO(synk): if hidden/output dims grow to ~2048+ at f32, tile each layer's
# Dout (extra grid axis / emit_pipeline) instead of holding all weights resident.


if __name__ == "__main__":
    key = jax.random.PRNGKey(0)
    k_p1, k_x1, k_p2, k_x2 = jax.random.split(key, 4)

    # ---- Test 1: small, f32 weights (exact PyTorch-matching numerics) -------
    dims = [16, 32, 32, 8]
    batch = 8
    params = init_mlp_params(k_p1, dims, activation='relu')
    weights, bias_all, bias_slices = prep_params_for_kernel(params, jnp.float32)
    x = jax.random.normal(k_x1, (batch, dims[0]), dtype=jnp.float32)

    out = mlp_forward(x, weights, bias_all, bias_slices=bias_slices,
                      out_dim=dims[-1])
    jax.block_until_ready(out)
    assert out.shape == (batch, dims[-1]), out.shape
    assert out.dtype == jnp.float32
    ref = mlp_reference(x, params, jnp.float32)
    assert jnp.allclose(out, ref, atol=1e-4, rtol=1e-4), \
        float(jnp.max(jnp.abs(out - ref)))

    # ---- Test 2: larger batch, bf16 weights, >=2 grid steps, ragged batch ---
    dims2 = [64, 256, 256, 128]
    batch2 = 300                      # not a multiple of 8 -> exercises sublane pad
    params2 = init_mlp_params(k_p2, dims2, activation='relu')
    w2, b2_all, b2_slices = prep_params_for_kernel(params2, jnp.bfloat16)
    x2 = jax.random.normal(k_x2, (batch2, dims2[0]), dtype=jnp.float32)

    out2 = mlp_forward(x2, w2, b2_all, bias_slices=b2_slices, out_dim=dims2[-1])
    jax.block_until_ready(out2)
    assert out2.shape == (batch2, dims2[-1]), out2.shape
    ref2 = mlp_reference(x2, params2, jnp.bfloat16)   # same bf16-weight math
    assert jnp.allclose(out2, ref2, atol=5e-2, rtol=5e-2), \
        float(jnp.max(jnp.abs(out2 - ref2)))

    print("KERNEL_OK")
</pallas_src>

<mosaic_0001>
module attributes {stable_mosaic.version = 11 : i64} {
  func.func @_fused_mlp_kernel(%arg0: i32, %arg1: memref<8x16xf32, #tpu.memory_space<vmem>>, %arg2: memref<16x128xf32, #tpu.memory_space<vmem>>, %arg3: memref<128x128xf32, #tpu.memory_space<vmem>>, %arg4: memref<128x128xf32, #tpu.memory_space<vmem>>, %arg5: memref<1x384xf32, #tpu.memory_space<vmem>>, %arg6: memref<8x128xf32, #tpu.memory_space<vmem>>) attributes {dimension_semantics = [#tpu.dimension_semantics<parallel>], iteration_bounds = array<i64: 1>, scalar_prefetch = 0 : i64, scratch_operands = 0 : i64, tpu.core_type = #tpu.core_type<tc>, window_params = [{transform_indices = @transform_0, window_bounds = array<i64: 8, 16>}, {pipeline_mode = #tpu.pipeline_mode<synchronous>, transform_indices = @transform_1, window_bounds = array<i64: 16, 128>}, {pipeline_mode = #tpu.pipeline_mode<synchronous>, transform_indices = @transform_2, window_bounds = array<i64: 128, 128>}, {pipeline_mode = #tpu.pipeline_mode<synchronous>, transform_indices = @transform_3, window_bounds = array<i64: 128, 128>}, {pipeline_mode = #tpu.pipeline_mode<synchronous>, transform_indices = @transform_4, window_bounds = array<i64: 1, 384>}, {transform_indices = @transform_5, window_bounds = array<i64: 8, 128>}]} {
    %c0 = arith.constant 0 : index
    %c0_0 = arith.constant 0 : index
    %0 = vector.load %arg1[%c0, %c0_0] : memref<8x16xf32, #tpu.memory_space<vmem>>, vector<8x16xf32>
    %c0_1 = arith.constant 0 : index
    %c0_2 = arith.constant 0 : index
    %1 = vector.load %arg2[%c0_1, %c0_2] : memref<16x128xf32, #tpu.memory_space<vmem>>, vector<16x128xf32>
    %cst = arith.constant dense<0.000000e+00> : vector<8x128xf32>
    %2 = tpu.matmul %0, %1, %cst {dimension_numbers = #tpu.dot_dimension_numbers<[1], [0], [0], [1], [0, 0, 1, 1], [], []>} : vector<8x16xf32>, vector<16x128xf32>, vector<8x128xf32> -> vector<8x128xf32>
    %c0_3 = arith.constant 0 : index
    %c0_4 = arith.constant 0 : index
    %3 = vector.load %arg5[%c0_3, %c0_4] : memref<1x384xf32, #tpu.memory_space<vmem>>, vector<1x128xf32>
    %4 = vector.broadcast %3 : vector<1x128xf32> to vector<8x128xf32>
    %5 = arith.addf %2, %4 : vector<8x128xf32>
    %cst_5 = arith.constant 0.000000e+00 : f32
    %6 = vector.broadcast %cst_5 : f32 to vector<8x128xf32>
    %7 = arith.maximumf %5, %6 : vector<8x128xf32>
    %c0_6 = arith.constant 0 : index
    %c0_7 = arith.constant 0 : index
    %8 = vector.load %arg3[%c0_6, %c0_7] : memref<128x128xf32, #tpu.memory_space<vmem>>, vector<128x128xf32>
    %cst_8 = arith.constant dense<0.000000e+00> : vector<8x128xf32>
    %9 = tpu.matmul %7, %8, %cst_8 {dimension_numbers = #tpu.dot_dimension_numbers<[1], [0], [0], [1], [0, 0, 1, 1], [], []>} : vector<8x128xf32>, vector<128x128xf32>, vector<8x128xf32> -> vector<8x128xf32>
    %c0_9 = arith.constant 0 : index
    %c128 = arith.constant 128 : index
    %10 = vector.load %arg5[%c0_9, %c128] : memref<1x384xf32, #tpu.memory_space<vmem>>, vector<1x128xf32>
    %11 = vector.broadcast %10 : vector<1x128xf32> to vector<8x128xf32>
    %12 = arith.addf %9, %11 : vector<8x128xf32>
    %cst_10 = arith.constant 0.000000e+00 : f32
    %13 = vector.broadcast %cst_10 : f32 to vector<8x128xf32>
    %14 = arith.maximumf %12, %13 : vector<8x128xf32>
    %c0_11 = arith.constant 0 : index
    %c0_12 = arith.constant 0 : index
    %15 = vector.load %arg4[%c0_11, %c0_12] : memref<128x128xf32, #tpu.memory_space<vmem>>, vector<128x128xf32>
    %cst_13 = arith.constant dense<0.000000e+00> : vector<8x128xf32>
    %16 = tpu.matmul %14, %15, %cst_13 {dimension_numbers = #tpu.dot_dimension_numbers<[1], [0], [0], [1], [0, 0, 1, 1], [], []>} : vector<8x128xf32>, vector<128x128xf32>, vector<8x128xf32> -> vector<8x128xf32>
    %c0_14 = arith.constant 0 : index
    %c256 = arith.constant 256 : index
    %17 = vector.load %arg5[%c0_14, %c256] : memref<1x384xf32, #tpu.memory_space<vmem>>, vector<1x128xf32>
    %18 = vector.broadcast %17 : vector<1x128xf32> to vector<8x128xf32>
    %19 = arith.addf %16, %18 : vector<8x128xf32>
    %c0_15 = arith.constant 0 : index
    %c0_16 = arith.constant 0 : index
    %20 = vector.load %arg6[%c0_15, %c0_16] : memref<8x128xf32, #tpu.memory_space<vmem>>, vector<8x128xf32>
    tpu.vector_store %arg6[%c0_15, %c0_16], %19 {strides = array<i32>} : memref<8x128xf32, #tpu.memory_space<vmem>>, vector<8x128xf32>,
    return
  }
  func.func @transform_0(%arg0: i32) -> (i32, i32) {
    %c0_i32 = arith.constant 0 : i32
    %c0_i32_0 = arith.constant 0 : i32
    return %arg0, %c0_i32 : i32, i32
  }
  func.func @transform_1(%arg0: i32) -> (i32, i32) {
    %c0_i32 = arith.constant 0 : i32
    %c0_i32_0 = arith.constant 0 : i32
    %c0_i32_1 = arith.constant 0 : i32
    return %c0_i32, %c0_i32_0 : i32, i32
  }
  func.func @transform_2(%arg0: i32) -> (i32, i32) {
    %c0_i32 = arith.constant 0 : i32
    %c0_i32_0 = arith.constant 0 : i32
    %c0_i32_1 = arith.constant 0 : i32
    return %c0_i32, %c0_i32_0 : i32, i32
  }
  func.func @transform_3(%arg0: i32) -> (i32, i32) {
    %c0_i32 = arith.constant 0 : i32
    %c0_i32_0 = arith.constant 0 : i32
    %c0_i32_1 = arith.constant 0 : i32
    return %c0_i32, %c0_i32_0 : i32, i32
  }
  func.func @transform_4(%arg0: i32) -> (i32, i32) {
    %c0_i32 = arith.constant 0 : i32
    %c0_i32_0 = arith.constant 0 : i32
    %c0_i32_1 = arith.constant 0 : i32
    return %c0_i32, %c0_i32_0 : i32, i32
  }
  func.func @transform_5(%arg0: i32) -> (i32, i32) {
    %c0_i32 = arith.constant 0 : i32
    %c0_i32_0 = arith.constant 0 : i32
    return %arg0, %c0_i32 : i32, i32
  }
}

</mosaic_0001>

<llo_original>
// kernel: mlp_forward.1
$region0: #{mlp_forward.1}
  #allocation0 [shape = 'u32[]', space=smem, size = 0x4, offset = 0x4, fixed_abs, tag = 'smem constant byte address 0x4 - core index']
  #allocation1 [shape = 'u32[144,128]{1,0:T(1,128)}', space=vmem, size = 0x12000, scoped, tag = 'internal scratch']
  %s0 = inlined_call_operand.hbm [shape: f32[8,16], index: 0, kind: input, shape index: {}]
  %s1 = inlined_call_operand.hbm [shape: f32[16,128], index: 1, kind: input, shape index: {}]
  %s2 = inlined_call_operand.hbm [shape: f32[128,128], index: 2, kind: input, shape index: {}]
  %s3 = inlined_call_operand.hbm [shape: f32[128,128], index: 3, kind: input, shape index: {}]
  %s4 = inlined_call_operand.vmem [shape: f32[1,384], index: 4, kind: input, shape index: {}]
  %s5 = inlined_call_operand.hbm [shape: f32[8,128], index: 5, kind: output, shape index: {}]
  %s6 = sld [smem:[#allocation0]]
  $region46: #{mlp_forward.1} parent=0
    _
  %s8 = ssub.s32 1, %s6
  %s9 = scalar_select 0, %s8, %s6
  $region1: #{mlp_forward.1} parent=0
    #allocation2 [shape = 'u8[4096]{0}', space=vmem, size = 0x1000, scoped, tag = 'input window, operand 0, single buffered']
    #allocation3 [shape = 's32[1]{0}', space=sflag, size = 0x4, scoped, tag = 'scoped memory for mlp_forward.1']
    #allocation4 [shape = 's32[1]{0}', space=sflag, size = 0x4, scoped, tag = 'scoped memory for mlp_forward.1']
    #allocation5 [shape = 'u8[8192]{0}', space=vmem, size = 0x2000, scoped, tag = 'input window, operand 1, single buffered']
    #allocation6 [shape = 's32[1]{0}', space=sflag, size = 0x4, scoped, tag = 'scoped memory for mlp_forward.1']
    #allocation7 [shape = 'u8[65536]{0}', space=vmem, size = 0x10000, scoped, tag = 'input window, operand 2, single buffered']
    #allocation8 [shape = 'u8[65536]{0}', space=vmem, size = 0x10000, scoped, tag = 'input window, operand 3, single buffered']
    #allocation9 [shape = 's32[1]{0}', space=sflag, size = 0x4, scoped, tag = 'scoped memory for mlp_forward.1']
    #allocation10 [shape = 'u8[4096]{0}', space=vmem, size = 0x1000, scoped, tag = 'output window, operand 0, single buffered']
    %10 = vsyncpa [#allocation3], 0
    %11 = vsyncpa [#allocation6], 0
    %12 = vsyncpa [#allocation9], 0
    %13 = vsyncpa [#allocation4], 0
    // Predicated region
    $region2: #{mlp_forward.1} parent=1 // pred_check
      _
    $region3: #{mlp_forward.1} parent=1 // pred_check_branch
      %15 = sbr.rel (0) target = $region5
    $region4: #{mlp_forward.1} parent=1 // pred_region
      %s17 = ssub.s32 128, 128
      %18 = vsyncadd [#allocation3], %s17
      %s20 = sshll.u32 [#allocation2], 4
      %s21 = int_to_ptr.vmem [resolvable:$true] %s20
      %23 = dma.hbm_to_vmem [thread:$0]  %s0, 128, %s21, [#allocation3]
    $region5: #{mlp_forward.1} parent=1 // pred_fallthru
      _
    // Predicated region
    $region6: #{mlp_forward.1} parent=1 // pred_check
      _
    $region7: #{mlp_forward.1} parent=1 // pred_check_branch
      %25 = sbr.rel (0) target = $region9
    $region8: #{mlp_forward.1} parent=1 // pred_region
      %s27 = ssub.s32 256, 256
      %28 = vsyncadd [#allocation6], %s27
      %s29 = sshll.u32 [#allocation5], 4
      %s30 = int_to_ptr.vmem [resolvable:$true] %s29
      %35 = dma.hbm_to_vmem [thread:$0]  %s1, 256, %s30, [#allocation6], 128, 128, 8
    $region9: #{mlp_forward.1} parent=1 // pred_fallthru
      _
    // Predicated region
    $region10: #{mlp_forward.1} parent=1 // pred_check
      _
    $region11: #{mlp_forward.1} parent=1 // pred_check_branch
      %37 = sbr.rel (0) target = $region13
    $region12: #{mlp_forward.1} parent=1 // pred_region
      %s39 = ssub.s32 2048, 2048
      %40 = vsyncadd [#allocation6], %s39
      %s41 = sshll.u32 [#allocation7], 4
      %s42 = int_to_ptr.vmem [resolvable:$true] %s41
      %47 = dma.hbm_to_vmem [thread:$0]  %s2, 2048, %s42, [#allocation6], 128, 128, 8
    $region13: #{mlp_forward.1} parent=1 // pred_fallthru
      _
    // Predicated region
    $region14: #{mlp_forward.1} parent=1 // pred_check
      _
    $region15: #{mlp_forward.1} parent=1 // pred_check_branch
      %49 = sbr.rel (0) target = $region17
    $region16: #{mlp_forward.1} parent=1 // pred_region
      %s51 = ssub.s32 2048, 2048
      %52 = vsyncadd [#allocation9], %s51
      %s53 = sshll.u32 [#allocation8], 4
      %s54 = int_to_ptr.vmem [resolvable:$true] %s53
      %59 = dma.hbm_to_vmem [thread:$0]  %s3, 2048, %s54, [#allocation9], 128, 128, 8
    $region17: #{mlp_forward.1} parent=1 // pred_fallthru
      _
    // Predicated region
    $region18: #{mlp_forward.1} parent=1 // pred_check
      _
    $region19: #{mlp_forward.1} parent=1 // pred_check_branch
      %61 = sbr.rel (0) target = $region21
    $region20: #{mlp_forward.1} parent=1 // pred_region
      _
    $region21: #{mlp_forward.1} parent=1 // pred_fallthru
      _
    // Predicated region
    $region22: #{mlp_forward.1} parent=1 // pred_check
      _
    $region23: #{mlp_forward.1} parent=1 // pred_check_branch
      %63 = sbr.rel (0) target = $region25
    $region24: #{mlp_forward.1} parent=1 // pred_region
      %64 = dma.done [#allocation3], 128
    $region25: #{mlp_forward.1} parent=1 // pred_fallthru
      _
    // Predicated region
    $region26: #{mlp_forward.1} parent=1 // pred_check
      _
    $region27: #{mlp_forward.1} parent=1 // pred_check_branch
      %66 = sbr.rel (0) target = $region29
    $region28: #{mlp_forward.1} parent=1 // pred_region
      %67 = dma.done [#allocation6], 256
    $region29: #{mlp_forward.1} parent=1 // pred_fallthru
      _
    // Predicated region
    $region30: #{mlp_forward.1} parent=1 // pred_check
      _
    $region31: #{mlp_forward.1} parent=1 // pred_check_branch
      %69 = sbr.rel (0) target = $region33
    $region32: #{mlp_forward.1} parent=1 // pred_region
      %70 = dma.done [#allocation6], 2048
    $region33: #{mlp_forward.1} parent=1 // pred_fallthru
      _
    // Predicated region
    $region34: #{mlp_forward.1} parent=1 // pred_check
      _
    $region35: #{mlp_forward.1} parent=1 // pred_check_branch
      %72 = sbr.rel (0) target = $region37
    $region36: #{mlp_forward.1} parent=1 // pred_region
      %73 = dma.done [#allocation9], 2048
    $region37: #{mlp_forward.1} parent=1 // pred_fallthru
      _
    %v74 = vld [vmem:[#allocation2] sm:$0xff]
    %v75 = vld [vmem:[#allocation5] sm:$0xff]
    %v76 = vld [vmem:[#allocation5 + $0x8] sm:$0xff]
    %v77 = vld [vmem:[%s4] sm:$0x1]
    %v79 = vlaneseq
    %v80 = vshrl.u32 %v79, 7
    %v81 = vsub.s32 0, %v80
    %v82 = vrot.slane %v77, %v81
    %vm84 = vcmask 130048
    %v86 = vsel %vm84, %v74, 0
    %88 = vmatprep.subr.mxu0 0.0
    %89 = vmatpush1.msra.mxu0 %v75
    %90 = vmatprep.subr.mxu0 0.0
    %91 = vmatpush1.msra.mxu0 %v76
    %92 = vmatprep.subr.mxu0 0.0
    %93 = vmatpush1.msra.mxu0 0.0
    %94 = vmatprep.subr.mxu0 0.0
    %95 = vmatpush1.msra.mxu0 0.0
    %96 = vmatprep.subr.mxu0 0.0
    %97 = vmatpush1.msra.mxu0 0.0
    %98 = vmatprep.subr.mxu0 0.0
    %99 = vmatpush1.msra.mxu0 0.0
    %100 = vmatprep.subr.mxu0 0.0
    %101 = vmatpush1.msra.mxu0 0.0
    %102 = vmatprep.subr.mxu0 0.0
    %103 = vmatpush1.msra.mxu0 0.0
    %104 = vmatprep.subr.mxu0 0.0
    %105 = vmatpush1.msra.mxu0 0.0
    %106 = vmatprep.subr.mxu0 0.0
    %107 = vmatpush1.msra.mxu0 0.0
    %108 = vmatprep.subr.mxu0 0.0
    %109 = vmatpush1.msra.mxu0 0.0
    %110 = vmatprep.subr.mxu0 0.0
    %111 = vmatpush1.msra.mxu0 0.0
    %112 = vmatprep.subr.mxu0 0.0
    %113 = vmatpush1.msra.mxu0 0.0
    %114 = vmatprep.subr.mxu0 0.0
    %115 = vmatpush1.msra.mxu0 0.0
    %116 = vmatprep.subr.mxu0 0.0
    %117 = vmatpush1.msra.mxu0 0.0
    %118 = vmatprep.subr.mxu0 0.0
    %119 = vmatpush1.msra.mxu0 0.0
    %120 = vmatprep.subr.mxu0 0.0
    %121 = vmatpush1.msra.mxu0 0.0
    %122 = vmatprep.subr.mxu0 0.0
    %123 = vmatpush1.msra.mxu0 0.0
    %124 = vmatprep.subr.mxu0 0.0
    %125 = vmatpush1.msra.mxu0 0.0
    %126 = vmatprep.subr.mxu0 0.0
    %127 = vmatpush1.msra.mxu0 0.0
    %128 = vmatprep.subr.mxu0 0.0
    %129 = vmatpush1.msra.mxu0 0.0
    %130 = vmatprep.subr.mxu0 0.0
    %131 = vmatpush1.msra.mxu0 0.0
    %132 = vmatprep.subr.mxu0 0.0
    %133 = vmatpush1.msra.mxu0 0.0
    %134 = vmatprep.subr.mxu0 0.0
    %135 = vmatpush1.msra.mxu0 0.0
    %136 = vmatprep.subr.mxu0 0.0
    %137 = vmatpush1.msra.mxu0 0.0
    %138 = vmatprep.subr.mxu0 0.0
    %139 = vmatpush1.msra.mxu0 0.0
    %140 = vmatprep.subr.mxu0 0.0
    %141 = vmatpush1.msra.mxu0 0.0
    %142 = vmatprep.subr.mxu0 0.0
    %143 = vmatpush1.msra.mxu0 0.0
    %144 = vmatprep.subr.mxu0 0.0
    %145 = vmatpush1.msra.mxu0 0.0
    %146 = vmatprep.subr.mxu0 0.0
    %147 = vmatpush1.msra.mxu0 0.0
    %148 = vmatprep.subr.mxu0 0.0
    %149 = vmatpush1.msra.mxu0 0.0
    %150 = vmatprep.subr.mxu0 0.0
    %151 = vmatpush1.msra.mxu0 0.0
    %152 = vmatprep.mubr.f32.mxu0 0.0
    %153 = vmatmul.mubr.f32.gmra.mrb[0].mxu0 %v86
    %v154 = vpop.f32.mrb[0].mxu0
    %v155 = vadd.f32 %v82, %v154
    %v156 = vpop.f32.mrb[0].mxu0
    %157 = vdwg.mxu0
    %v158 = vmax.f32 %v155, 0.0
    %v159 = vld [vmem:[#allocation7] sm:$0xff]
    %v160 = vld [vmem:[#allocation7 + $0x8] sm:$0xff]
    %v161 = vld [vmem:[#allocation7 + $0x10] sm:$0xff]
    %v162 = vld [vmem:[#allocation7 + $0x18] sm:$0xff]
    %v163 = vld [vmem:[#allocation7 + $0x20] sm:$0xff]
    %v164 = vld [vmem:[#allocation7 + $0x28] sm:$0xff]
    %v165 = vld [vmem:[#allocation7 + $0x30] sm:$0xff]
    %v166 = vld [vmem:[#allocation7 + $0x38] sm:$0xff]
    %v167 = vld [vmem:[#allocation7 + $0x40] sm:$0xff]
    %v168 = vld [vmem:[#allocation7 + $0x48] sm:$0xff]
    %v169 = vld [vmem:[#allocation7 + $0x50] sm:$0xff]
    %v170 = vld [vmem:[#allocation7 + $0x58] sm:$0xff]
    %v171 = vld [vmem:[#allocation7 + $0x60] sm:$0xff]
    %v172 = vld [vmem:[#allocation7 + $0x68] sm:$0xff]
    %v173 = vld [vmem:[#allocation7 + $0x70] sm:$0xff]
    %v174 = vld [vmem:[#allocation7 + $0x78] sm:$0xff]
    %v175 = vld [vmem:[%s4 + $0x1] sm:$0x1]
    %v177 = vlaneseq
    %v178 = vshrl.u32 %v177, 7
    %v179 = vsub.s32 0, %v178
    %v180 = vrot.slane %v175, %v179
    %182 = vmatprep.subr.mxu0 0.0
    %183 = vmatpush1.msra.mxu0 %v159
    %184 = vmatprep.subr.mxu0 0.0
    %185 = vmatpush1.msra.mxu0 %v160
    %186 = vmatprep.subr.mxu0 0.0
    %187 = vmatpush1.msra.mxu0 %v161
    %188 = vmatprep.subr.mxu0 0.0
    %189 = vmatpush1.msra.mxu0 %v162
    %190 = vmatprep.subr.mxu0 0.0
    %191 = vmatpush1.msra.mxu0 %v163
    %192 = vmatprep.subr.mxu0 0.0
    %193 = vmatpush1.msra.mxu0 %v164
    %194 = vmatprep.subr.mxu0 0.0
    %195 = vmatpush1.msra.mxu0 %v165
    %196 = vmatprep.subr.mxu0 0.0
    %197 = vmatpush1.msra.mxu0 %v166
    %198 = vmatprep.subr.mxu0 0.0
    %199 = vmatpush1.msra.mxu0 %v167
    %200 = vmatprep.subr.mxu0 0.0
    %201 = vmatpush1.msra.mxu0 %v168
    %202 = vmatprep.subr.mxu0 0.0
    %203 = vmatpush1.msra.mxu0 %v169
    %204 = vmatprep.subr.mxu0 0.0
    %205 = vmatpush1.msra.mxu0 %v170
    %206 = vmatprep.subr.mxu0 0.0
    %207 = vmatpush1.msra.mxu0 %v171
    %208 = vmatprep.subr.mxu0 0.0
    %209 = vmatpush1.msra.mxu0 %v172
    %210 = vmatprep.subr.mxu0 0.0
    %211 = vmatpush1.msra.mxu0 %v173
    %212 = vmatprep.subr.mxu0 0.0
    %213 = vmatpush1.msra.mxu0 %v174
    %214 = vmatprep.subr.mxu0 0.0
    %215 = vmatpush1.msra.mxu0 0.0
    %216 = vmatprep.subr.mxu0 0.0
    %217 = vmatpush1.msra.mxu0 0.0
    %218 = vmatprep.subr.mxu0 0.0
    %219 = vmatpush1.msra.mxu0 0.0
    %220 = vmatprep.subr.mxu0 0.0
    %221 = vmatpush1.msra.mxu0 0.0
    %222 = vmatprep.subr.mxu0 0.0
    %223 = vmatpush1.msra.mxu0 0.0
    %224 = vmatprep.subr.mxu0 0.0
    %225 = vmatpush1.msra.mxu0 0.0
    %226 = vmatprep.subr.mxu0 0.0
    %227 = vmatpush1.msra.mxu0 0.0
    %228 = vmatprep.subr.mxu0 0.0
    %229 = vmatpush1.msra.mxu0 0.0
    %230 = vmatprep.subr.mxu0 0.0
    %231 = vmatpush1.msra.mxu0 0.0
    %232 = vmatprep.subr.mxu0 0.0
    %233 = vmatpush1.msra.mxu0 0.0
    %234 = vmatprep.subr.mxu0 0.0
    %235 = vmatpush1.msra.mxu0 0.0
    %236 = vmatprep.subr.mxu0 0.0
    %237 = vmatpush1.msra.mxu0 0.0
    %238 = vmatprep.subr.mxu0 0.0
    %239 = vmatpush1.msra.mxu0 0.0
    %240 = vmatprep.subr.mxu0 0.0
    %241 = vmatpush1.msra.mxu0 0.0
    %242 = vmatprep.subr.mxu0 0.0
    %243 = vmatpush1.msra.mxu0 0.0
    %244 = vmatprep.subr.mxu0 0.0
    %245 = vmatpush1.msra.mxu0 0.0
    %246 = vmatprep.mubr.f32.mxu0 0.0
    %247 = vmatmul.mubr.f32.gmra.mrb[0].mxu0 %v158
    %v248 = vpop.f32.mrb[0].mxu0
    %v249 = vadd.f32 %v180, %v248
    %v250 = vpop.f32.mrb[0].mxu0
    %251 = vdwg.mxu0
    %v252 = vmax.f32 %v249, 0.0
    %v253 = vld [vmem:[#allocation8] sm:$0xff]
    %v254 = vld [vmem:[#allocation8 + $0x8] sm:$0xff]
    %v255 = vld [vmem:[#allocation8 + $0x10] sm:$0xff]
    %v256 = vld [vmem:[#allocation8 + $0x18] sm:$0xff]
    %v257 = vld [vmem:[#allocation8 + $0x20] sm:$0xff]
    %v258 = vld [vmem:[#allocation8 + $0x28] sm:$0xff]
    %v259 = vld [vmem:[#allocation8 + $0x30] sm:$0xff]
    %v260 = vld [vmem:[#allocation8 + $0x38] sm:$0xff]
    %v261 = vld [vmem:[#allocation8 + $0x40] sm:$0xff]
    %v262 = vld [vmem:[#allocation8 + $0x48] sm:$0xff]
    %v263 = vld [vmem:[#allocation8 + $0x50] sm:$0xff]
    %v264 = vld [vmem:[#allocation8 + $0x58] sm:$0xff]
    %v265 = vld [vmem:[#allocation8 + $0x60] sm:$0xff]
    %v266 = vld [vmem:[#allocation8 + $0x68] sm:$0xff]
    %v267 = vld [vmem:[#allocation8 + $0x70] sm:$0xff]
    %v268 = vld [vmem:[#allocation8 + $0x78] sm:$0xff]
    %v269 = vld [vmem:[%s4 + $0x2] sm:$0x1]
    %v271 = vlaneseq
    %v272 = vshrl.u32 %v271, 7
    %v273 = vsub.s32 0, %v272
    %v274 = vrot.slane %v269, %v273
    %276 = vmatprep.subr.mxu0 0.0
    %277 = vmatpush1.msra.mxu0 %v253
    %278 = vmatprep.subr.mxu0 0.0
    %279 = vmatpush1.msra.mxu0 %v254
    %280 = vmatprep.subr.mxu0 0.0
    %281 = vmatpush1.msra.mxu0 %v255
    %282 = vmatprep.subr.mxu0 0.0
    %283 = vmatpush1.msra.mxu0 %v256
    %284 = vmatprep.subr.mxu0 0.0
    %285 = vmatpush1.msra.mxu0 %v257
    %286 = vmatprep.subr.mxu0 0.0
    %287 = vmatpush1.msra.mxu0 %v258
    %288 = vmatprep.subr.mxu0 0.0
    %289 = vmatpush1.msra.mxu0 %v259
    %290 = vmatprep.subr.mxu0 0.0
    %291 = vmatpush1.msra.mxu0 %v260
    %292 = vmatprep.subr.mxu0 0.0
    %293 = vmatpush1.msra.mxu0 %v261
    %294 = vmatprep.subr.mxu0 0.0
    %295 = vmatpush1.msra.mxu0 %v262
    %296 = vmatprep.subr.mxu0 0.0
    %297 = vmatpush1.msra.mxu0 %v263
    %298 = vmatprep.subr.mxu0 0.0
    %299 = vmatpush1.msra.mxu0 %v264
    %300 = vmatprep.subr.mxu0 0.0
    %301 = vmatpush1.msra.mxu0 %v265
    %302 = vmatprep.subr.mxu0 0.0
    %303 = vmatpush1.msra.mxu0 %v266
    %304 = vmatprep.subr.mxu0 0.0
    %305 = vmatpush1.msra.mxu0 %v267
    %306 = vmatprep.subr.mxu0 0.0
    %307 = vmatpush1.msra.mxu0 %v268
    %308 = vmatprep.subr.mxu0 0.0
    %309 = vmatpush1.msra.mxu0 0.0
    %310 = vmatprep.subr.mxu0 0.0
    %311 = vmatpush1.msra.mxu0 0.0
    %312 = vmatprep.subr.mxu0 0.0
    %313 = vmatpush1.msra.mxu0 0.0
    %314 = vmatprep.subr.mxu0 0.0
    %315 = vmatpush1.msra.mxu0 0.0
    %316 = vmatprep.subr.mxu0 0.0
    %317 = vmatpush1.msra.mxu0 0.0
    %318 = vmatprep.subr.mxu0 0.0
    %319 = vmatpush1.msra.mxu0 0.0
    %320 = vmatprep.subr.mxu0 0.0
    %321 = vmatpush1.msra.mxu0 0.0
    %322 = vmatprep.subr.mxu0 0.0
    %323 = vmatpush1.msra.mxu0 0.0
    %324 = vmatprep.subr.mxu0 0.0
    %325 = vmatpush1.msra.mxu0 0.0
    %326 = vmatprep.subr.mxu0 0.0
    %327 = vmatpush1.msra.mxu0 0.0
    %328 = vmatprep.subr.mxu0 0.0
    %329 = vmatpush1.msra.mxu0 0.0
    %330 = vmatprep.subr.mxu0 0.0
    %331 = vmatpush1.msra.mxu0 0.0
    %332 = vmatprep.subr.mxu0 0.0
    %333 = vmatpush1.msra.mxu0 0.0
    %334 = vmatprep.subr.mxu0 0.0
    %335 = vmatpush1.msra.mxu0 0.0
    %336 = vmatprep.subr.mxu0 0.0
    %337 = vmatpush1.msra.mxu0 0.0
    %338 = vmatprep.subr.mxu0 0.0
    %339 = vmatpush1.msra.mxu0 0.0
    %340 = vmatprep.mubr.f32.mxu0 0.0
    %341 = vmatmul.mubr.f32.gmra.mrb[0].mxu0 %v252
    %v342 = vpop.f32.mrb[0].mxu0
    %v343 = vadd.f32 %v274, %v342
    %v344 = vpop.f32.mrb[0].mxu0
    %345 = vdwg.mxu0
    %346 = vst [vmem:[#allocation10] sm:$0xff] %v343
    // Predicated region
    $region38: #{mlp_forward.1} parent=1 // pred_check
      _
    $region39: #{mlp_forward.1} parent=1 // pred_check_branch
      %348 = sbr.rel (0) target = $region41
    $region40: #{mlp_forward.1} parent=1 // pred_region
      %s350 = ssub.s32 128, 128
      %351 = vsyncadd [#allocation4], %s350
      %s353 = sshll.u32 [#allocation10], 4
      %s354 = int_to_ptr.vmem [resolvable:$true] %s353
      %356 = dma.vmem_to_hbm [thread:$0]  %s354, 128, %s5, [#allocation4]
    $region41: #{mlp_forward.1} parent=1 // pred_fallthru
      _
    // Predicated region
    $region42: #{mlp_forward.1} parent=1 // pred_check
      _
    $region43: #{mlp_forward.1} parent=1 // pred_check_branch
      %358 = sbr.rel (0) target = $region45
    $region44: #{mlp_forward.1} parent=1 // pred_region
      %359 = dma.done [#allocation4], 128
    $region45: #{mlp_forward.1} parent=1 // pred_fallthru
      _
    %360 = vsyncpa [#allocation3], 1
    %361 = vsyncpa [#allocation6], 1
    %362 = vsyncpa [#allocation9], 1
    %363 = vsyncpa [#allocation4], 1

</llo_original>
